<compile_context>
chip_gen: v7x
topology: tpu7x:2x2x1
jax: 0.10.0
libtpu: 0.0.40
codegen_flags: <defaults>
</compile_context>

<pallas_src>
import jax
import jax.numpy as jnp
from jax.experimental import pallas as pl
from jax.experimental.pallas import tpu as pltpu


def _quat_to_so3_kernel(q_ref, out_ref):
    # q_ref:   (4, S_tile, 128)  -- planes are w, x, y, z
    # out_ref: (9, S_tile, 128)  -- planes are r00, r01, ..., r22
    w = q_ref[0]
    x = q_ref[1]
    y = q_ref[2]
    z = q_ref[3]

    # Strength reduction: fold the "2 *" into doubled components.
    x2 = x + x
    y2 = y + y
    z2 = z + z

    ww = w * w
    xx = x * x
    yy = y * y
    zz = z * z

    xy2 = x2 * y   # 2*x*y
    xz2 = x2 * z   # 2*x*z
    yz2 = y2 * z   # 2*y*z
    wx2 = w * x2   # 2*w*x
    wy2 = w * y2   # 2*w*y
    wz2 = w * z2   # 2*w*z

    # Direct per-plane dense stores -- do NOT stage through a VMEM scratch.
    out_ref[0] = ww + xx - yy - zz   # r00
    out_ref[1] = xy2 - wz2           # r01 = 2*(xy - wz)
    out_ref[2] = wy2 + xz2           # r02 = 2*(wy + xz)
    out_ref[3] = xy2 + wz2           # r10 = 2*(xy + wz)
    out_ref[4] = ww - xx + yy - zz   # r11
    out_ref[5] = yz2 - wx2           # r12 = 2*(yz - wx)
    out_ref[6] = xz2 - wy2           # r20 = 2*(xz - wy)
    out_ref[7] = wx2 + yz2           # r21 = 2*(wx + yz)
    out_ref[8] = ww - xx - yy + zz   # r22


def _tiling(n):
    """Rows-of-128 packing: returns (total_rows, tile_rows, grid_steps)."""
    s_raw = max(1, pl.cdiv(n, 128))       # rows of 128 quaternions
    s8 = ((s_raw + 7) // 8) * 8           # sublane (8) alignment
    if s8 > 512:
        # Large batches: fixed 512-row tiles.
        # VMEM @512 rows: 1.0 MiB in + 2.25 MiB out, x2 (double-buffer) ~6.5 MiB
        # -> fits default scoped VMEM on v5e/v6e/v7x with big headroom.
        s_tile = 512
    elif s8 >= 64:
        # Medium batches: split into exactly 2 steps so the grid can be
        # sharded across both v7x TensorCores ("parallel" axis).
        s_tile = ((s8 + 15) // 16) * 8    # ~half, multiple of 8
    else:
        # Tiny batches: one step; splitting would only add per-step overhead.
        s_tile = s8
    grid = (s8 + s_tile - 1) // s_tile
    return grid * s_tile, s_tile, grid


def _so3_planes(q_planes):
    """Component-major fast path: q_planes (4, n) -> rotation planes (9, n).

    No AoS<->SoA transposes at all -- only a pad/slice copy when n is not a
    multiple of the tile. This is the reviewer-preferred SoA contract.
    """
    n = q_planes.shape[1]
    s, s_tile, grid = _tiling(n)
    npad = s * 128

    qt = jnp.pad(q_planes, ((0, 0), (0, npad - n))).reshape(4, s, 128)

    out = pl.pallas_call(
        _quat_to_so3_kernel,
        out_shape=jax.ShapeDtypeStruct((9, s, 128), q_planes.dtype),
        grid=(grid,),
        in_specs=[pl.BlockSpec((4, s_tile, 128), lambda i: (0, i, 0))],
        out_specs=pl.BlockSpec((9, s_tile, 128), lambda i: (0, i, 0)),
        compiler_params=pltpu.CompilerParams(
            dimension_semantics=("parallel",),      # megacore-shardable axis
            vmem_limit_bytes=32 * 1024 * 1024,      # explicit; ample everywhere
        ),
    )(qt)

    return out.reshape(9, npad)[:, :n]


def _quaternion_to_so3_impl(q):
    """Module-equivalent AoS contract: q (..., 4) -> (prod(leading), 3, 3).

    The AoS->SoA input pass (q.T + pad) and SoA->AoS output pass (.T) are each
    a single fused XLA copy; they are the unavoidable cost of the (n, 3, 3)
    layout.  Use `quaternion_to_so3_planes` to avoid them entirely.
    """
    qf = q.reshape(-1, 4)
    planes = _so3_planes(qf.T)            # (9, n)
    return planes.T.reshape(-1, 3, 3)


quaternion_to_so3 = jax.jit(_quaternion_to_so3_impl)
quaternion_to_so3_planes = jax.jit(_so3_planes)


def _reference(q):
    """Pure-JAX reference mirroring the PyTorch forward exactly (no normalize)."""
    pairs = jnp.array([(i, j) for i in range(4) for j in range(i, 4)])
    prods = q[..., pairs[:, 0]] * q[..., pairs[:, 1]]
    ww, wx, wy, wz, xx, xy, xz, yy, yz, zz = [prods[..., k] for k in range(10)]
    m = jnp.stack(
        [
            ww + xx - yy - zz, 2 * (xy - wz), 2 * (wy + xz),
            2 * (xy + wz), ww - xx + yy - zz, 2 * (yz - wx),
            2 * (xz - wy), 2 * (wx + yz), ww - xx - yy + zz,
        ],
        axis=-1,
    )
    return m.reshape(-1, 3, 3)


if __name__ == "__main__":
    key = jax.random.PRNGKey(0)
    # small example: a (2, 4, 4) batch of quaternions (last dim = 4)
    q = jax.random.normal(key, (2, 4, 4), dtype=jnp.float32)

    # AoS (module-equivalent) path.
    r = jax.block_until_ready(quaternion_to_so3(q))
    r_ref = _reference(q)
    assert r.shape == (8, 3, 3), r.shape
    assert jnp.allclose(r, r_ref, atol=1e-5, rtol=1e-5), "AoS mismatch vs reference"

    # Component-major (SoA) fast path: (4, n) -> (9, n), no wrapper transposes.
    q_planes = q.reshape(-1, 4).T
    planes = jax.block_until_ready(quaternion_to_so3_planes(q_planes))
    assert planes.shape == (9, 8), planes.shape
    assert jnp.allclose(planes.T.reshape(-1, 3, 3), r_ref, atol=1e-5, rtol=1e-5), \
        "SoA mismatch vs reference"

    print("KERNEL_OK")
</pallas_src>

<mosaic_0001>
module attributes {stable_mosaic.version = 11 : i64} {
  func.func @_quat_to_so3_kernel(%arg0: i32, %arg1: memref<4x8x128xf32, #tpu.memory_space<vmem>>, %arg2: memref<9x8x128xf32, #tpu.memory_space<vmem>>) attributes {dimension_semantics = [#tpu.dimension_semantics<parallel>], iteration_bounds = array<i64: 1>, scalar_prefetch = 0 : i64, scratch_operands = 0 : i64, tpu.core_type = #tpu.core_type<tc>, window_params = [{transform_indices = @transform_0, window_bounds = array<i64: 4, 8, 128>}, {transform_indices = @transform_1, window_bounds = array<i64: 9, 8, 128>}]} {
    %c0 = arith.constant 0 : index
    %c0_0 = arith.constant 0 : index
    %c0_1 = arith.constant 0 : index
    %0 = vector.load %arg1[%c0, %c0_0, %c0_1] : memref<4x8x128xf32, #tpu.memory_space<vmem>>, vector<1x8x128xf32>
    %1 = vector.shape_cast %0 : vector<1x8x128xf32> to vector<8x128xf32>
    %c1 = arith.constant 1 : index
    %c0_2 = arith.constant 0 : index
    %c0_3 = arith.constant 0 : index
    %2 = vector.load %arg1[%c1, %c0_2, %c0_3] : memref<4x8x128xf32, #tpu.memory_space<vmem>>, vector<1x8x128xf32>
    %3 = vector.shape_cast %2 : vector<1x8x128xf32> to vector<8x128xf32>
    %c2 = arith.constant 2 : index
    %c0_4 = arith.constant 0 : index
    %c0_5 = arith.constant 0 : index
    %4 = vector.load %arg1[%c2, %c0_4, %c0_5] : memref<4x8x128xf32, #tpu.memory_space<vmem>>, vector<1x8x128xf32>
    %5 = vector.shape_cast %4 : vector<1x8x128xf32> to vector<8x128xf32>
    %c3 = arith.constant 3 : index
    %c0_6 = arith.constant 0 : index
    %c0_7 = arith.constant 0 : index
    %6 = vector.load %arg1[%c3, %c0_6, %c0_7] : memref<4x8x128xf32, #tpu.memory_space<vmem>>, vector<1x8x128xf32>
    %7 = vector.shape_cast %6 : vector<1x8x128xf32> to vector<8x128xf32>
    %8 = arith.addf %3, %3 : vector<8x128xf32>
    %9 = arith.addf %5, %5 : vector<8x128xf32>
    %10 = arith.addf %7, %7 : vector<8x128xf32>
    %11 = arith.mulf %1, %1 : vector<8x128xf32>
    %12 = arith.mulf %3, %3 : vector<8x128xf32>
    %13 = arith.mulf %5, %5 : vector<8x128xf32>
    %14 = arith.mulf %7, %7 : vector<8x128xf32>
    %15 = arith.mulf %8, %5 : vector<8x128xf32>
    %16 = arith.mulf %8, %7 : vector<8x128xf32>
    %17 = arith.mulf %9, %7 : vector<8x128xf32>
    %18 = arith.mulf %1, %8 : vector<8x128xf32>
    %19 = arith.mulf %1, %9 : vector<8x128xf32>
    %20 = arith.mulf %1, %10 : vector<8x128xf32>
    %21 = arith.addf %11, %12 : vector<8x128xf32>
    %22 = arith.subf %21, %13 : vector<8x128xf32>
    %23 = arith.subf %22, %14 : vector<8x128xf32>
    %c0_8 = arith.constant 0 : index
    %c0_9 = arith.constant 0 : index
    %c0_10 = arith.constant 0 : index
    %24 = vector.load %arg2[%c0_8, %c0_9, %c0_10] : memref<9x8x128xf32, #tpu.memory_space<vmem>>, vector<1x8x128xf32>
    %25 = vector.shape_cast %24 : vector<1x8x128xf32> to vector<8x128xf32>
    %26 = vector.shape_cast %23 : vector<8x128xf32> to vector<1x8x128xf32>
    tpu.vector_store %arg2[%c0_8, %c0_9, %c0_10], %26 {strides = array<i32>} : memref<9x8x128xf32, #tpu.memory_space<vmem>>, vector<1x8x128xf32>,
    %27 = arith.subf %15, %20 : vector<8x128xf32>
    %c1_11 = arith.constant 1 : index
    %c0_12 = arith.constant 0 : index
    %c0_13 = arith.constant 0 : index
    %28 = vector.load %arg2[%c1_11, %c0_12, %c0_13] : memref<9x8x128xf32, #tpu.memory_space<vmem>>, vector<1x8x128xf32>
    %29 = vector.shape_cast %28 : vector<1x8x128xf32> to vector<8x128xf32>
    %30 = vector.shape_cast %27 : vector<8x128xf32> to vector<1x8x128xf32>
    tpu.vector_store %arg2[%c1_11, %c0_12, %c0_13], %30 {strides = array<i32>} : memref<9x8x128xf32, #tpu.memory_space<vmem>>, vector<1x8x128xf32>,
    %31 = arith.addf %19, %16 : vector<8x128xf32>
    %c2_14 = arith.constant 2 : index
    %c0_15 = arith.constant 0 : index
    %c0_16 = arith.constant 0 : index
    %32 = vector.load %arg2[%c2_14, %c0_15, %c0_16] : memref<9x8x128xf32, #tpu.memory_space<vmem>>, vector<1x8x128xf32>
    %33 = vector.shape_cast %32 : vector<1x8x128xf32> to vector<8x128xf32>
    %34 = vector.shape_cast %31 : vector<8x128xf32> to vector<1x8x128xf32>
    tpu.vector_store %arg2[%c2_14, %c0_15, %c0_16], %34 {strides = array<i32>} : memref<9x8x128xf32, #tpu.memory_space<vmem>>, vector<1x8x128xf32>,
    %35 = arith.addf %15, %20 : vector<8x128xf32>
    %c3_17 = arith.constant 3 : index
    %c0_18 = arith.constant 0 : index
    %c0_19 = arith.constant 0 : index
    %36 = vector.load %arg2[%c3_17, %c0_18, %c0_19] : memref<9x8x128xf32, #tpu.memory_space<vmem>>, vector<1x8x128xf32>
    %37 = vector.shape_cast %36 : vector<1x8x128xf32> to vector<8x128xf32>
    %38 = vector.shape_cast %35 : vector<8x128xf32> to vector<1x8x128xf32>
    tpu.vector_store %arg2[%c3_17, %c0_18, %c0_19], %38 {strides = array<i32>} : memref<9x8x128xf32, #tpu.memory_space<vmem>>, vector<1x8x128xf32>,
    %39 = arith.subf %11, %12 : vector<8x128xf32>
    %40 = arith.addf %39, %13 : vector<8x128xf32>
    %41 = arith.subf %40, %14 : vector<8x128xf32>
    %c4 = arith.constant 4 : index
    %c0_20 = arith.constant 0 : index
    %c0_21 = arith.constant 0 : index
    %42 = vector.load %arg2[%c4, %c0_20, %c0_21] : memref<9x8x128xf32, #tpu.memory_space<vmem>>, vector<1x8x128xf32>
    %43 = vector.shape_cast %42 : vector<1x8x128xf32> to vector<8x128xf32>
    %44 = vector.shape_cast %41 : vector<8x128xf32> to vector<1x8x128xf32>
    tpu.vector_store %arg2[%c4, %c0_20, %c0_21], %44 {strides = array<i32>} : memref<9x8x128xf32, #tpu.memory_space<vmem>>, vector<1x8x128xf32>,
    %45 = arith.subf %17, %18 : vector<8x128xf32>
    %c5 = arith.constant 5 : index
    %c0_22 = arith.constant 0 : index
    %c0_23 = arith.constant 0 : index
    %46 = vector.load %arg2[%c5, %c0_22, %c0_23] : memref<9x8x128xf32, #tpu.memory_space<vmem>>, vector<1x8x128xf32>
    %47 = vector.shape_cast %46 : vector<1x8x128xf32> to vector<8x128xf32>
    %48 = vector.shape_cast %45 : vector<8x128xf32> to vector<1x8x128xf32>
    tpu.vector_store %arg2[%c5, %c0_22, %c0_23], %48 {strides = array<i32>} : memref<9x8x128xf32, #tpu.memory_space<vmem>>, vector<1x8x128xf32>,
    %49 = arith.subf %16, %19 : vector<8x128xf32>
    %c6 = arith.constant 6 : index
    %c0_24 = arith.constant 0 : index
    %c0_25 = arith.constant 0 : index
    %50 = vector.load %arg2[%c6, %c0_24, %c0_25] : memref<9x8x128xf32, #tpu.memory_space<vmem>>, vector<1x8x128xf32>
    %51 = vector.shape_cast %50 : vector<1x8x128xf32> to vector<8x128xf32>
    %52 = vector.shape_cast %49 : vector<8x128xf32> to vector<1x8x128xf32>
    tpu.vector_store %arg2[%c6, %c0_24, %c0_25], %52 {strides = array<i32>} : memref<9x8x128xf32, #tpu.memory_space<vmem>>, vector<1x8x128xf32>,
    %53 = arith.addf %18, %17 : vector<8x128xf32>
    %c7 = arith.constant 7 : index
    %c0_26 = arith.constant 0 : index
    %c0_27 = arith.constant 0 : index
    %54 = vector.load %arg2[%c7, %c0_26, %c0_27] : memref<9x8x128xf32, #tpu.memory_space<vmem>>, vector<1x8x128xf32>
    %55 = vector.shape_cast %54 : vector<1x8x128xf32> to vector<8x128xf32>
    %56 = vector.shape_cast %53 : vector<8x128xf32> to vector<1x8x128xf32>
    tpu.vector_store %arg2[%c7, %c0_26, %c0_27], %56 {strides = array<i32>} : memref<9x8x128xf32, #tpu.memory_space<vmem>>, vector<1x8x128xf32>,
    %57 = arith.subf %11, %12 : vector<8x128xf32>
    %58 = arith.subf %57, %13 : vector<8x128xf32>
    %59 = arith.addf %58, %14 : vector<8x128xf32>
    %c8 = arith.constant 8 : index
    %c0_28 = arith.constant 0 : index
    %c0_29 = arith.constant 0 : index
    %60 = vector.load %arg2[%c8, %c0_28, %c0_29] : memref<9x8x128xf32, #tpu.memory_space<vmem>>, vector<1x8x128xf32>
    %61 = vector.shape_cast %60 : vector<1x8x128xf32> to vector<8x128xf32>
    %62 = vector.shape_cast %59 : vector<8x128xf32> to vector<1x8x128xf32>
    tpu.vector_store %arg2[%c8, %c0_28, %c0_29], %62 {strides = array<i32>} : memref<9x8x128xf32, #tpu.memory_space<vmem>>, vector<1x8x128xf32>,
    return
  }
  func.func @transform_0(%arg0: i32) -> (i32, i32, i32) {
    %c0_i32 = arith.constant 0 : i32
    %c0_i32_0 = arith.constant 0 : i32
    %c0_i32_1 = arith.constant 0 : i32
    return %c0_i32, %arg0, %c0_i32_0 : i32, i32, i32
  }
  func.func @transform_1(%arg0: i32) -> (i32, i32, i32) {
    %c0_i32 = arith.constant 0 : i32
    %c0_i32_0 = arith.constant 0 : i32
    %c0_i32_1 = arith.constant 0 : i32
    return %c0_i32, %arg0, %c0_i32_0 : i32, i32, i32
  }
}

</mosaic_0001>

<llo_original>
// kernel: _quaternion_to_so3_impl.1
$region0: #{_quaternion_to_so3_impl.1}
  #allocation0 [shape = 'u32[]', space=smem, size = 0x4, offset = 0x4, fixed_abs, tag = 'smem constant byte address 0x4 - core index']
  #allocation1 [shape = 'u32[144,128]{1,0:T(1,128)}', space=vmem, size = 0x12000, scoped, tag = 'internal scratch']
  %s0 = inlined_call_operand.vmem [shape: f32[4,8,128], index: 0, kind: input, shape index: {}]
  %s1 = inlined_call_operand.vmem [shape: f32[9,8,128], index: 1, kind: output, shape index: {}]
  %s2 = sld [smem:[#allocation0]]
  $region14: #{_quaternion_to_so3_impl.1} parent=0
    _
  %s4 = ssub.s32 1, %s2
  %s5 = scalar_select 0, %s4, %s2
  // Predicated region
  $region2: #{_quaternion_to_so3_impl.1} parent=0 // pred_check
    _
  $region3: #{_quaternion_to_so3_impl.1} parent=0 // pred_check_branch
    %7 = sbr.rel (0) target = $region5
  $region4: #{_quaternion_to_so3_impl.1} parent=0 // pred_region
    _
  $region5: #{_quaternion_to_so3_impl.1} parent=0 // pred_fallthru
    _
  %v8 = vld [vmem:[%s0] sm:$0xff]
  %s9 = scalar_lea.vmem %s0, 8
  %v10 = vld [vmem:[%s9] sm:$0xff]
  %s11 = scalar_lea.vmem %s0, 16
  %v12 = vld [vmem:[%s11] sm:$0xff]
  %s13 = scalar_lea.vmem %s0, 24
  %v14 = vld [vmem:[%s13] sm:$0xff]
  %v15 = vadd.f32 %v10, %v10
  %v16 = vadd.f32 %v12, %v12
  %v17 = vadd.f32 %v14, %v14
  %v18 = vmul.f32 %v8, %v8
  %v19 = vmul.f32 %v10, %v10
  %v20 = vmul.f32 %v12, %v12
  %v21 = vmul.f32 %v14, %v14
  %v22 = vmul.f32 %v15, %v12
  %v23 = vmul.f32 %v15, %v14
  %v24 = vmul.f32 %v16, %v14
  %v25 = vmul.f32 %v8, %v15
  %v26 = vmul.f32 %v8, %v16
  %v27 = vmul.f32 %v8, %v17
  %v28 = vadd.f32 %v18, %v19
  %v29 = vsub.f32 %v28, %v20
  %v30 = vsub.f32 %v29, %v21
  %31 = vst [vmem:[%s1] sm:$0xff] %v30
  %v32 = vsub.f32 %v22, %v27
  %s33 = scalar_lea.vmem %s1, 8
  %34 = vst [vmem:[%s33] sm:$0xff] %v32
  %v35 = vadd.f32 %v26, %v23
  %s36 = scalar_lea.vmem %s1, 16
  %37 = vst [vmem:[%s36] sm:$0xff] %v35
  %v38 = vadd.f32 %v22, %v27
  %s39 = scalar_lea.vmem %s1, 24
  %40 = vst [vmem:[%s39] sm:$0xff] %v38
  %v41 = vsub.f32 %v18, %v19
  %v42 = vadd.f32 %v41, %v20
  %v43 = vsub.f32 %v42, %v21
  %s44 = scalar_lea.vmem %s1, 32
  %45 = vst [vmem:[%s44] sm:$0xff] %v43
  %v46 = vsub.f32 %v24, %v25
  %s47 = scalar_lea.vmem %s1, 40
  %48 = vst [vmem:[%s47] sm:$0xff] %v46
  %v49 = vsub.f32 %v23, %v26
  %s50 = scalar_lea.vmem %s1, 48
  %51 = vst [vmem:[%s50] sm:$0xff] %v49
  %v52 = vadd.f32 %v25, %v24
  %s53 = scalar_lea.vmem %s1, 56
  %54 = vst [vmem:[%s53] sm:$0xff] %v52
  %v55 = vsub.f32 %v41, %v20
  %v56 = vadd.f32 %v55, %v21
  %s57 = scalar_lea.vmem %s1, 64
  %58 = vst [vmem:[%s57] sm:$0xff] %v56
  // Predicated region
  $region6: #{_quaternion_to_so3_impl.1} parent=0 // pred_check
    _
  $region7: #{_quaternion_to_so3_impl.1} parent=0 // pred_check_branch
    %60 = sbr.rel (0) target = $region9
  $region8: #{_quaternion_to_so3_impl.1} parent=0 // pred_region
    _
  $region9: #{_quaternion_to_so3_impl.1} parent=0 // pred_fallthru
    _
  // Predicated region
  $region10: #{_quaternion_to_so3_impl.1} parent=0 // pred_check
    _
  $region11: #{_quaternion_to_so3_impl.1} parent=0 // pred_check_branch
    %62 = sbr.rel (0) target = $region13
  $region12: #{_quaternion_to_so3_impl.1} parent=0 // pred_region
    _
  $region13: #{_quaternion_to_so3_impl.1} parent=0 // pred_fallthru
    _

</llo_original>
